<compile_context>
chip_gen: v7x
topology: tpu7x:2x2x1
jax: 0.10.0
libtpu: 0.0.40
codegen_flags: <defaults>
</compile_context>

<pallas_src>
import functools
import math

import jax
import jax.numpy as jnp
from jax.experimental import pallas as pl
from jax.experimental.pallas import tpu as pltpu

_HIDDEN = 128
_LANE = 128


def _round_up(x, m):
    return ((x + m - 1) // m) * m


def _sublane_multiple(dtype):
    # Native second-minor tile: f32 -> 8, bf16 -> 16, int8/fp8 -> 32.
    return max(8, 32 // jnp.dtype(dtype).itemsize)


def _ppo_mlp_kernel(x_ref, w1_ref, b1_ref, w2_ref, b2_ref, wh_ref, bh_ref,
                    out_ref):
    # One batch tile per grid step. Weights/biases have constant index_maps,
    # so they stay VMEM-resident; only the x tile and the fused output slab
    # are streamed / pipelined.
    h1 = jnp.dot(x_ref[...], w1_ref[...], preferred_element_type=jnp.float32)
    h1 = jnp.maximum(h1 + b1_ref[...], 0.0)              # f32 elementwise (v5e-safe)

    h2 = jnp.dot(h1.astype(w2_ref.dtype), w2_ref[...],
                 preferred_element_type=jnp.float32)
    h2 = jnp.maximum(h2 + b2_ref[...], 0.0)

    # Fused policy|value head: one lane-dense matmul, one unmasked store,
    # cast to the (possibly bf16) output dtype only at the final store.
    out = jnp.dot(h2.astype(wh_ref.dtype), wh_ref[...],
                  preferred_element_type=jnp.float32) + bh_ref[...]
    out_ref[...] = out.astype(out_ref.dtype)


def prepare_params(params, *, mxu_dtype=jnp.bfloat16):
    """One-time layout prep (hoisted out of the per-call path):
    cast weights, fuse policy+value heads into one 128-lane-padded head,
    pad w1's K dim to the native sublane tile, reshape biases to (1, N)."""
    obs_dim, hidden = params["w1"].shape
    num_outputs = params["wp"].shape[1]
    k_pad = _round_up(obs_dim, _sublane_multiple(mxu_dtype))
    head_n = _round_up(num_outputs + 1, _LANE)

    def as_row(b):  # defensive: accept PyTorch-style 1-D biases
        return jnp.asarray(b, jnp.float32).reshape(1, -1)

    w1 = jnp.zeros((k_pad, hidden), mxu_dtype).at[:obs_dim].set(
        params["w1"].astype(mxu_dtype))
    w2 = params["w2"].astype(mxu_dtype)
    wh = jnp.zeros((hidden, head_n), mxu_dtype)
    wh = wh.at[:, :num_outputs].set(params["wp"].astype(mxu_dtype))
    wh = wh.at[:, num_outputs:num_outputs + 1].set(params["wv"].astype(mxu_dtype))

    bh = jnp.zeros((1, head_n), jnp.float32)
    bh = bh.at[:, :num_outputs].set(as_row(params["bp"]))
    bh = bh.at[:, num_outputs:num_outputs + 1].set(as_row(params["bv"]))

    prep = dict(w1=w1, b1=as_row(params["b1"]), w2=w2, b2=as_row(params["b2"]),
                wh=wh, bh=bh)
    meta = dict(obs_dim=int(obs_dim), num_outputs=int(num_outputs),
                hidden=int(hidden), k_pad=int(k_pad), head_n=int(head_n))
    return prep, meta


def _ppo_forward_impl(x, prep, *, meta, block_batch, out_dtype):
    batch, obs_dim_in = x.shape
    obs_dim = meta["obs_dim"]
    hidden = meta["hidden"]
    k_pad = meta["k_pad"]
    head_n = meta["head_n"]
    num_outputs = meta["num_outputs"]
    assert obs_dim_in == obs_dim
    mxu_dtype = prep["w1"].dtype

    row_mult = max(_sublane_multiple(mxu_dtype), _sublane_multiple(out_dtype))

    # Tile choice: >=2 grid steps when the batch allows it (so v7x's two
    # TensorCores / HBM paths are both used), tiles <= block_batch, padding
    # waste bounded to < one row_mult chunk per tile.
    n_tiles = max(2, -(-batch // block_batch))
    tb = _round_up(max(1, -(-batch // n_tiles)), row_mult)
    tb = min(tb, _round_up(block_batch, row_mult))
    batch_pad = _round_up(batch, tb)
    grid = (batch_pad // tb,)

    # Fused pad under jit (no materialized eager scatter): K only to the
    # sublane tile (NOT 128 lanes), batch to the tile multiple so every
    # output store stays unmasked.
    x_p = jnp.pad(x.astype(mxu_dtype),
                  ((0, batch_pad - batch), (0, k_pad - obs_dim)))

    def resident(shape):
        # Constant block index -> stays in VMEM across all grid steps.
        return pl.BlockSpec(shape, lambda i: (0, 0))

    in_specs = [
        pl.BlockSpec((tb, k_pad), lambda i: (i, 0)),   # streamed x tiles
        resident((k_pad, hidden)), resident((1, hidden)),
        resident((hidden, hidden)), resident((1, hidden)),
        resident((hidden, head_n)), resident((1, head_n)),
    ]
    out_specs = pl.BlockSpec((tb, head_n), lambda i: (i, 0))

    in_bytes = jnp.dtype(mxu_dtype).itemsize
    out_bytes = jnp.dtype(out_dtype).itemsize
    flops = 2 * batch_pad * (k_pad * hidden + hidden * hidden + hidden * head_n)
    bytes_accessed = (
        batch_pad * k_pad * in_bytes                                    # x stream
        + (k_pad * hidden + hidden * hidden + hidden * head_n) * in_bytes  # weights
        + (2 * hidden + head_n) * 4                                     # biases (f32)
        + batch_pad * head_n * out_bytes)                               # output slab
    cost = pl.CostEstimate(flops=flops, transcendentals=0,
                           bytes_accessed=bytes_accessed)

    out = pl.pallas_call(
        _ppo_mlp_kernel,
        out_shape=jax.ShapeDtypeStruct((batch_pad, head_n), out_dtype),
        grid=grid,
        in_specs=in_specs,
        out_specs=out_specs,
        compiler_params=pltpu.CompilerParams(
            dimension_semantics=("parallel",),      # megacore sharding on v7x
            vmem_limit_bytes=32 * 1024 * 1024,
        ),
        cost_estimate=cost,
    )(x_p, prep["w1"], prep["b1"], prep["w2"], prep["b2"],
      prep["wh"], prep["bh"])

    # Single slice of the useful columns, split under jit (no second gather).
    head = out[:batch, :num_outputs + 1].astype(jnp.float32)
    logits = head[:, :num_outputs]
    value = head[:, num_outputs:num_outputs + 1]
    return logits, value


def make_ppo_forward(params, *, block_batch=2048, mxu_dtype=jnp.bfloat16,
                     out_dtype=jnp.bfloat16):
    """Returns a jitted forward: x[batch, obs_dim] -> (logits, value[:, :1]).
    value.squeeze(-1) reproduces value_function()."""
    prep, meta = prepare_params(params, mxu_dtype=mxu_dtype)
    impl = functools.partial(_ppo_forward_impl, meta=meta,
                             block_batch=int(block_batch),
                             out_dtype=jnp.dtype(out_dtype))
    jitted = jax.jit(impl)
    return lambda x: jitted(x, prep)


def init_params(key, obs_dim, num_outputs):
    """Mimic PyTorch nn.Linear default init (U(-1/sqrt(fan_in), 1/sqrt(fan_in))).
    Weights stored as [in, out] so the kernel computes y = x @ W + b."""
    def linear(key, fan_in, fan_out):
        kw, kb = jax.random.split(key)
        bound = 1.0 / math.sqrt(fan_in)
        w = jax.random.uniform(kw, (fan_in, fan_out), jnp.float32, -bound, bound)
        b = jax.random.uniform(kb, (1, fan_out), jnp.float32, -bound, bound)
        return w, b

    k1, k2, k3, k4 = jax.random.split(key, 4)
    w1, b1 = linear(k1, obs_dim, _HIDDEN)
    w2, b2 = linear(k2, _HIDDEN, _HIDDEN)
    wp, bp = linear(k3, _HIDDEN, num_outputs)
    wv, bv = linear(k4, _HIDDEN, 1)
    return dict(w1=w1, b1=b1, w2=w2, b2=b2, wp=wp, bp=bp, wv=wv, bv=bv)


def reference_forward(x, p):
    h1 = jnp.maximum(x @ p["w1"] + p["b1"], 0.0)
    h2 = jnp.maximum(h1 @ p["w2"] + p["b2"], 0.0)
    return h2 @ p["wp"] + p["bp"], h2 @ p["wv"] + p["bv"]


if __name__ == "__main__":
    obs_dim = 5
    num_outputs = 4
    batch = 10   # deliberately not a multiple of 8/16 -> exercises ragged padding

    key = jax.random.PRNGKey(0)
    k_obs, k_params = jax.random.split(key)

    params = init_params(k_params, obs_dim, num_outputs)
    obs_flat = jax.random.normal(k_obs, (batch, obs_dim), jnp.float32)

    ref_logits, ref_value = reference_forward(obs_flat, params)

    # Exact f32 path (also exercises a multi-step grid: tb=8 -> 2 tiles).
    fwd_f32 = make_ppo_forward(params, mxu_dtype=jnp.float32,
                               out_dtype=jnp.float32)
    logits, value = fwd_f32(obs_flat)
    jax.block_until_ready((logits, value))
    value_out = value.squeeze(-1)            # value_function() equivalent
    assert logits.shape == (batch, num_outputs)
    assert value_out.shape == (batch,)
    assert jnp.allclose(logits, ref_logits, atol=1e-5)
    assert jnp.allclose(value, ref_value, atol=1e-5)

    # Default fast path: bf16 streamed x / resident weights / output slab,
    # f32 accumulate + f32 bias/ReLU.
    fwd_bf16 = make_ppo_forward(params)
    logits_bf, value_bf = fwd_bf16(obs_flat)
    logits_bf, value_bf = fwd_bf16(obs_flat)   # 2nd call reuses the jitted exec
    jax.block_until_ready((logits_bf, value_bf))
    assert logits_bf.shape == (batch, num_outputs)
    assert jnp.allclose(logits_bf, ref_logits, atol=5e-2, rtol=5e-2)
    assert jnp.allclose(value_bf, ref_value, atol=5e-2, rtol=5e-2)

    print("KERNEL_OK")
</pallas_src>

<mosaic_0001>
module attributes {stable_mosaic.version = 11 : i64} {
  func.func @_ppo_mlp_kernel(%arg0: i32, %arg1: memref<8x8xf32, #tpu.memory_space<vmem>>, %arg2: memref<8x128xf32, #tpu.memory_space<vmem>>, %arg3: memref<1x128xf32, #tpu.memory_space<vmem>>, %arg4: memref<128x128xf32, #tpu.memory_space<vmem>>, %arg5: memref<1x128xf32, #tpu.memory_space<vmem>>, %arg6: memref<128x128xf32, #tpu.memory_space<vmem>>, %arg7: memref<1x128xf32, #tpu.memory_space<vmem>>, %arg8: memref<8x128xf32, #tpu.memory_space<vmem>>) attributes {dimension_semantics = [#tpu.dimension_semantics<parallel>], iteration_bounds = array<i64: 2>, scalar_prefetch = 0 : i64, scratch_operands = 0 : i64, tpu.core_type = #tpu.core_type<tc>, window_params = [{transform_indices = @transform_0, window_bounds = array<i64: 8, 8>}, {pipeline_mode = #tpu.pipeline_mode<synchronous>, transform_indices = @transform_1, window_bounds = array<i64: 8, 128>}, {pipeline_mode = #tpu.pipeline_mode<synchronous>, transform_indices = @transform_2, window_bounds = array<i64: 1, 128>}, {pipeline_mode = #tpu.pipeline_mode<synchronous>, transform_indices = @transform_3, window_bounds = array<i64: 128, 128>}, {pipeline_mode = #tpu.pipeline_mode<synchronous>, transform_indices = @transform_4, window_bounds = array<i64: 1, 128>}, {pipeline_mode = #tpu.pipeline_mode<synchronous>, transform_indices = @transform_5, window_bounds = array<i64: 128, 128>}, {pipeline_mode = #tpu.pipeline_mode<synchronous>, transform_indices = @transform_6, window_bounds = array<i64: 1, 128>}, {transform_indices = @transform_7, window_bounds = array<i64: 8, 128>}]} {
    %c0 = arith.constant 0 : index
    %c0_0 = arith.constant 0 : index
    %0 = vector.load %arg1[%c0, %c0_0] : memref<8x8xf32, #tpu.memory_space<vmem>>, vector<8x8xf32>
    %c0_1 = arith.constant 0 : index
    %c0_2 = arith.constant 0 : index
    %1 = vector.load %arg2[%c0_1, %c0_2] : memref<8x128xf32, #tpu.memory_space<vmem>>, vector<8x128xf32>
    %cst = arith.constant dense<0.000000e+00> : vector<8x128xf32>
    %2 = tpu.matmul %0, %1, %cst {dimension_numbers = #tpu.dot_dimension_numbers<[1], [0], [0], [1], [0, 0, 1, 1], [], []>} : vector<8x8xf32>, vector<8x128xf32>, vector<8x128xf32> -> vector<8x128xf32>
    %c0_3 = arith.constant 0 : index
    %c0_4 = arith.constant 0 : index
    %3 = vector.load %arg3[%c0_3, %c0_4] : memref<1x128xf32, #tpu.memory_space<vmem>>, vector<1x128xf32>
    %4 = vector.broadcast %3 : vector<1x128xf32> to vector<8x128xf32>
    %5 = arith.addf %2, %4 : vector<8x128xf32>
    %cst_5 = arith.constant 0.000000e+00 : f32
    %6 = vector.broadcast %cst_5 : f32 to vector<8x128xf32>
    %7 = arith.maximumf %5, %6 : vector<8x128xf32>
    %c0_6 = arith.constant 0 : index
    %c0_7 = arith.constant 0 : index
    %8 = vector.load %arg4[%c0_6, %c0_7] : memref<128x128xf32, #tpu.memory_space<vmem>>, vector<128x128xf32>
    %cst_8 = arith.constant dense<0.000000e+00> : vector<8x128xf32>
    %9 = tpu.matmul %7, %8, %cst_8 {dimension_numbers = #tpu.dot_dimension_numbers<[1], [0], [0], [1], [0, 0, 1, 1], [], []>} : vector<8x128xf32>, vector<128x128xf32>, vector<8x128xf32> -> vector<8x128xf32>
    %c0_9 = arith.constant 0 : index
    %c0_10 = arith.constant 0 : index
    %10 = vector.load %arg5[%c0_9, %c0_10] : memref<1x128xf32, #tpu.memory_space<vmem>>, vector<1x128xf32>
    %11 = vector.broadcast %10 : vector<1x128xf32> to vector<8x128xf32>
    %12 = arith.addf %9, %11 : vector<8x128xf32>
    %cst_11 = arith.constant 0.000000e+00 : f32
    %13 = vector.broadcast %cst_11 : f32 to vector<8x128xf32>
    %14 = arith.maximumf %12, %13 : vector<8x128xf32>
    %c0_12 = arith.constant 0 : index
    %c0_13 = arith.constant 0 : index
    %15 = vector.load %arg6[%c0_12, %c0_13] : memref<128x128xf32, #tpu.memory_space<vmem>>, vector<128x128xf32>
    %cst_14 = arith.constant dense<0.000000e+00> : vector<8x128xf32>
    %16 = tpu.matmul %14, %15, %cst_14 {dimension_numbers = #tpu.dot_dimension_numbers<[1], [0], [0], [1], [0, 0, 1, 1], [], []>} : vector<8x128xf32>, vector<128x128xf32>, vector<8x128xf32> -> vector<8x128xf32>
    %c0_15 = arith.constant 0 : index
    %c0_16 = arith.constant 0 : index
    %17 = vector.load %arg7[%c0_15, %c0_16] : memref<1x128xf32, #tpu.memory_space<vmem>>, vector<1x128xf32>
    %18 = vector.broadcast %17 : vector<1x128xf32> to vector<8x128xf32>
    %19 = arith.addf %16, %18 : vector<8x128xf32>
    %c0_17 = arith.constant 0 : index
    %c0_18 = arith.constant 0 : index
    %20 = vector.load %arg8[%c0_17, %c0_18] : memref<8x128xf32, #tpu.memory_space<vmem>>, vector<8x128xf32>
    tpu.vector_store %arg8[%c0_17, %c0_18], %19 {strides = array<i32>} : memref<8x128xf32, #tpu.memory_space<vmem>>, vector<8x128xf32>,
    return
  }
  func.func @transform_0(%arg0: i32) -> (i32, i32) {
    %c0_i32 = arith.constant 0 : i32
    %c0_i32_0 = arith.constant 0 : i32
    return %arg0, %c0_i32 : i32, i32
  }
  func.func @transform_1(%arg0: i32) -> (i32, i32) {
    %c0_i32 = arith.constant 0 : i32
    %c0_i32_0 = arith.constant 0 : i32
    %c0_i32_1 = arith.constant 0 : i32
    return %c0_i32, %c0_i32_0 : i32, i32
  }
  func.func @transform_2(%arg0: i32) -> (i32, i32) {
    %c0_i32 = arith.constant 0 : i32
    %c0_i32_0 = arith.constant 0 : i32
    %c0_i32_1 = arith.constant 0 : i32
    return %c0_i32, %c0_i32_0 : i32, i32
  }
  func.func @transform_3(%arg0: i32) -> (i32, i32) {
    %c0_i32 = arith.constant 0 : i32
    %c0_i32_0 = arith.constant 0 : i32
    %c0_i32_1 = arith.constant 0 : i32
    return %c0_i32, %c0_i32_0 : i32, i32
  }
  func.func @transform_4(%arg0: i32) -> (i32, i32) {
    %c0_i32 = arith.constant 0 : i32
    %c0_i32_0 = arith.constant 0 : i32
    %c0_i32_1 = arith.constant 0 : i32
    return %c0_i32, %c0_i32_0 : i32, i32
  }
  func.func @transform_5(%arg0: i32) -> (i32, i32) {
    %c0_i32 = arith.constant 0 : i32
    %c0_i32_0 = arith.constant 0 : i32
    %c0_i32_1 = arith.constant 0 : i32
    return %c0_i32, %c0_i32_0 : i32, i32
  }
  func.func @transform_6(%arg0: i32) -> (i32, i32) {
    %c0_i32 = arith.constant 0 : i32
    %c0_i32_0 = arith.constant 0 : i32
    %c0_i32_1 = arith.constant 0 : i32
    return %c0_i32, %c0_i32_0 : i32, i32
  }
  func.func @transform_7(%arg0: i32) -> (i32, i32) {
    %c0_i32 = arith.constant 0 : i32
    %c0_i32_0 = arith.constant 0 : i32
    return %arg0, %c0_i32 : i32, i32
  }
}

</mosaic_0001>

<llo_original>
// kernel: _ppo_forward_impl.1
$region0: #{_ppo_forward_impl.1}
  #allocation0 [shape = 'u32[]', space=smem, size = 0x4, offset = 0x4, fixed_abs, tag = 'smem constant byte address 0x4 - core index']
  #allocation1 [shape = 'u32[144,128]{1,0:T(1,128)}', space=vmem, size = 0x12000, scoped, tag = 'internal scratch']
  %s0 = inlined_call_operand.vmem [shape: f32[16,8], index: 0, kind: input, shape index: {}]
  %s1 = inlined_call_operand.vmem [shape: f32[8,128], index: 1, kind: input, shape index: {}]
  %s2 = inlined_call_operand.vmem [shape: f32[1,128], index: 2, kind: input, shape index: {}]
  %s3 = inlined_call_operand.hbm [shape: f32[128,128], index: 3, kind: input, shape index: {}]
  %s4 = inlined_call_operand.vmem [shape: f32[1,128], index: 4, kind: input, shape index: {}]
  %s5 = inlined_call_operand.hbm [shape: f32[128,128], index: 5, kind: input, shape index: {}]
  %s6 = inlined_call_operand.vmem [shape: f32[1,128], index: 6, kind: input, shape index: {}]
  %s7 = inlined_call_operand.vmem [shape: f32[16,128], index: 7, kind: output, shape index: {}]
  %s8 = sld [smem:[#allocation0]]
  $region69: #{_ppo_forward_impl.1} parent=0
    _
  %s10 = ssub.s32 1, %s8
  %s11 = scalar_select 0, %s10, %s8
  $region1: #{_ppo_forward_impl.1} parent=0
    #allocation2 [shape = 'u8[65536]{0}', space=vmem, size = 0x10000, scoped, tag = 'input window, operand 3, single buffered']
    #allocation3 [shape = 's32[2]{0}', space=sflag, size = 0x8, scoped, tag = 'scoped memory for _ppo_forward_impl.1']
    #allocation4 [shape = 'u8[65536]{0}', space=vmem, size = 0x10000, scoped, tag = 'input window, operand 5, single buffered']
    #allocation5 [shape = 's32[1]{0}', space=sflag, size = 0x4, scoped, tag = 'scoped memory for _ppo_forward_impl.1']
    %12 = vsyncpa [#allocation3], 0
    %13 = vsyncpa [#allocation5], 0
    loop: start=0, step=1, limit=4
    $region2: #{_ppo_forward_impl.1} parent=1 // loop_pre_header
      _
    $region3: #{_ppo_forward_impl.1} parent=1 // loop_header
      %s15 = sphi 0, %s19
      %p16 = scmp.ge.s32.totalorder %s15, 4
      %s25 = sphi 0, %s27
      %s28 = sphi 0, %s25
      %s29 = sphi 0, %s28
      %s45 = sphi 0, %s29
      %s49 = sphi 0, %s49
      %s51 = sphi 0, %s49
      %s52 = sphi 0, %s51
      %s66 = sphi 0, %s52
      %s70 = sphi 0, %s70
      %s72 = sphi 0, %s70
      %s73 = sphi 0, %s72
      %s87 = sphi 0, %s73
      %s91 = sphi 0, %s91
      %s93 = sphi 0, %s91
      %s94 = sphi 0, %s93
      %s108 = sphi 0, %s94
      %s112 = sphi 0, %s112
      %s114 = sphi 0, %s112
      %s115 = sphi 0, %s114
      %s129 = sphi 0, %s115
      %s133 = sphi 0, %s133
      %s135 = sphi 0, %s133
      %s136 = sphi 0, %s135
      %s150 = sphi 0, %s136
      %s154 = sphi 0, %s154
      %s156 = sphi 0, %s154
      %s157 = sphi 0, %s156
      %s171 = sphi 0, %s157
      %s177 = sphi 0, %s179
      %s180 = sphi 0, %s177
      %s181 = sphi 0, %s180
      %s197 = sphi 0, %s181
    $region4: #{_ppo_forward_impl.1} parent=1 // loop_header_branch
      %18 = sbr.rel (%p16) target = $region8
    $region5: #{_ppo_forward_impl.1} parent=1 // loop_body
      %s20 = ssub.s32 %s15, 1
      %s21 = ssub.s32 %s15, 2
      %s22 = sadd.s32 %s15, 1
      %s23 = ssub.s32 %s15, %s22
      %p24 = scmp.eq.s32.totalorder %s23, 0
      %s26 = sadd.s32 %s25, 1
      %s27 = scalar_select %p24, %s25, %s26
      %p30 = pneg %p24
      %p31 = scmp.eq.s32.totalorder %s15, 1
      %p32 = por %p30, %p31
      %p33 = scmp.ne.s32.totalorder %s25, %s28
      %p34 = scmp.eq.s32.totalorder %s15, 0
      %p35 = por %p33, %p34
      %p36 = scmp.ne.s32.totalorder %s25, %s28
      %p37 = scmp.eq.s32.totalorder %s20, 1
      %p38 = por %p36, %p37
      %p39 = scmp.ne.s32.totalorder %s28, %s29
      %p40 = scmp.eq.s32.totalorder %s20, 0
      %p41 = por %p39, %p40
      %p42 = scmp.ne.s32.totalorder %s28, %s29
      %p43 = scmp.eq.s32.totalorder %s21, 1
      %p44 = por %p42, %p43
      %p46 = scmp.ne.s32.totalorder %s29, %s45
      %p47 = scmp.eq.s32.totalorder %s21, 0
      %p48 = por %p46, %p47
      %s50 = sadd.s32 %s49, 1
      %p53 = scmp.eq.s32.totalorder %s15, 1
      %p54 = scmp.ne.s32.totalorder %s49, %s51
      %p55 = scmp.eq.s32.totalorder %s15, 0
      %p56 = por %p54, %p55
      %p57 = scmp.ne.s32.totalorder %s49, %s51
      %p58 = scmp.eq.s32.totalorder %s20, 1
      %p59 = por %p57, %p58
      %p60 = scmp.ne.s32.totalorder %s51, %s52
      %p61 = scmp.eq.s32.totalorder %s20, 0
      %p62 = por %p60, %p61
      %p63 = scmp.ne.s32.totalorder %s51, %s52
      %p64 = scmp.eq.s32.totalorder %s21, 1
      %p65 = por %p63, %p64
      %p67 = scmp.ne.s32.totalorder %s52, %s66
      %p68 = scmp.eq.s32.totalorder %s21, 0
      %p69 = por %p67, %p68
      %s71 = sadd.s32 %s70, 1
      %p74 = scmp.eq.s32.totalorder %s15, 1
      %p75 = scmp.ne.s32.totalorder %s70, %s72
      %p76 = scmp.eq.s32.totalorder %s15, 0
      %p77 = por %p75, %p76
      %p78 = scmp.ne.s32.totalorder %s70, %s72
      %p79 = scmp.eq.s32.totalorder %s20, 1
      %p80 = por %p78, %p79
      %p81 = scmp.ne.s32.totalorder %s72, %s73
      %p82 = scmp.eq.s32.totalorder %s20, 0
      %p83 = por %p81, %p82
      %p84 = scmp.ne.s32.totalorder %s72, %s73
      %p85 = scmp.eq.s32.totalorder %s21, 1
      %p86 = por %p84, %p85
      %p88 = scmp.ne.s32.totalorder %s73, %s87
      %p89 = scmp.eq.s32.totalorder %s21, 0
      %p90 = por %p88, %p89
      %s92 = sadd.s32 %s91, 1
      %p95 = scmp.eq.s32.totalorder %s15, 1
      %p96 = scmp.ne.s32.totalorder %s91, %s93
      %p97 = scmp.eq.s32.totalorder %s15, 0
      %p98 = por %p96, %p97
      %p99 = scmp.ne.s32.totalorder %s91, %s93
      %p100 = scmp.eq.s32.totalorder %s20, 1
      %p101 = por %p99, %p100
      %p102 = scmp.ne.s32.totalorder %s93, %s94
      %p103 = scmp.eq.s32.totalorder %s20, 0
      %p104 = por %p102, %p103
      %p105 = scmp.ne.s32.totalorder %s93, %s94
      %p106 = scmp.eq.s32.totalorder %s21, 1
      %p107 = por %p105, %p106
      %p109 = scmp.ne.s32.totalorder %s94, %s108
      %p110 = scmp.eq.s32.totalorder %s21, 0
      %p111 = por %p109, %p110
      %s113 = sadd.s32 %s112, 1
      %p116 = scmp.eq.s32.totalorder %s15, 1
      %p117 = scmp.ne.s32.totalorder %s112, %s114
      %p118 = scmp.eq.s32.totalorder %s15, 0
      %p119 = por %p117, %p118
      %p120 = scmp.ne.s32.totalorder %s112, %s114
      %p121 = scmp.eq.s32.totalorder %s20, 1
      %p122 = por %p120, %p121
      %p123 = scmp.ne.s32.totalorder %s114, %s115
      %p124 = scmp.eq.s32.totalorder %s20, 0
      %p125 = por %p123, %p124
      %p126 = scmp.ne.s32.totalorder %s114, %s115
      %p127 = scmp.eq.s32.totalorder %s21, 1
      %p128 = por %p126, %p127
      %p130 = scmp.ne.s32.totalorder %s115, %s129
      %p131 = scmp.eq.s32.totalorder %s21, 0
      %p132 = por %p130, %p131
      %s134 = sadd.s32 %s133, 1
      %p137 = scmp.eq.s32.totalorder %s15, 1
      %p138 = scmp.ne.s32.totalorder %s133, %s135
      %p139 = scmp.eq.s32.totalorder %s15, 0
      %p140 = por %p138, %p139
      %p141 = scmp.ne.s32.totalorder %s133, %s135
      %p142 = scmp.eq.s32.totalorder %s20, 1
      %p143 = por %p141, %p142
      %p144 = scmp.ne.s32.totalorder %s135, %s136
      %p145 = scmp.eq.s32.totalorder %s20, 0
      %p146 = por %p144, %p145
      %p147 = scmp.ne.s32.totalorder %s135, %s136
      %p148 = scmp.eq.s32.totalorder %s21, 1
      %p149 = por %p147, %p148
      %p151 = scmp.ne.s32.totalorder %s136, %s150
      %p152 = scmp.eq.s32.totalorder %s21, 0
      %p153 = por %p151, %p152
      %s155 = sadd.s32 %s154, 1
      %p158 = scmp.eq.s32.totalorder %s15, 1
      %p159 = scmp.ne.s32.totalorder %s154, %s156
      %p160 = scmp.eq.s32.totalorder %s15, 0
      %p161 = por %p159, %p160
      %p162 = scmp.ne.s32.totalorder %s154, %s156
      %p163 = scmp.eq.s32.totalorder %s20, 1
      %p164 = por %p162, %p163
      %p165 = scmp.ne.s32.totalorder %s156, %s157
      %p166 = scmp.eq.s32.totalorder %s20, 0
      %p167 = por %p165, %p166
      %p168 = scmp.ne.s32.totalorder %s156, %s157
      %p169 = scmp.eq.s32.totalorder %s21, 1
      %p170 = por %p168, %p169
      %p172 = scmp.ne.s32.totalorder %s157, %s171
      %p173 = scmp.eq.s32.totalorder %s21, 0
      %p174 = por %p172, %p173
      %s175 = ssub.s32 %s15, %s22
      %p176 = scmp.eq.s32.totalorder %s175, 0
      %s178 = sadd.s32 %s177, 1
      %s179 = scalar_select %p176, %s177, %s178
      %p182 = pneg %p176
      %p183 = scmp.eq.s32.totalorder %s15, 1
      %p184 = por %p182, %p183
      %p185 = scmp.ne.s32.totalorder %s177, %s180
      %p186 = scmp.eq.s32.totalorder %s15, 0
      %p187 = por %p185, %p186
      %p188 = scmp.ne.s32.totalorder %s177, %s180
      %p189 = scmp.eq.s32.totalorder %s20, 1
      %p190 = por %p188, %p189
      %p191 = scmp.ne.s32.totalorder %s180, %s181
      %p192 = scmp.eq.s32.totalorder %s20, 0
      %p193 = por %p191, %p192
      %p194 = scmp.ne.s32.totalorder %s180, %s181
      %p195 = scmp.eq.s32.totalorder %s21, 1
      %p196 = por %p194, %p195
      %p198 = scmp.ne.s32.totalorder %s181, %s197
      %p199 = scmp.eq.s32.totalorder %s21, 0
      %p200 = por %p198, %p199
      %p201 = scmp.le.s32.totalorder 1, %s15
      %p202 = scmp.lt.s32.totalorder %s15, 3
      %p203 = pnand %p201, %p202
      %p204 = pneg %p203
      // Predicated region
      $region9: #{_ppo_forward_impl.1} parent=5 // pred_check
        _
      $region10: #{_ppo_forward_impl.1} parent=5 // pred_check_branch
        %206 = sbr.rel (%p203) target = $region12
      $region11: #{_ppo_forward_impl.1} parent=5 // pred_region
        %s207 = ssub.s32 %s15, 1
        // Predicated region
        $region13: #{_ppo_forward_impl.1} parent=11 // pred_check
          %p208 = pneg %p62
        $region14: #{_ppo_forward_impl.1} parent=11 // pred_check_branch
          %210 = sbr.rel (%p208) target = $region16
        $region15: #{_ppo_forward_impl.1} parent=11 // pred_region
          _
        $region16: #{_ppo_forward_impl.1} parent=11 // pred_fallthru
          _
        // Predicated region
        $region17: #{_ppo_forward_impl.1} parent=11 // pred_check
          %p211 = pneg %p83
        $region18: #{_ppo_forward_impl.1} parent=11 // pred_check_branch
          %213 = sbr.rel (%p211) target = $region20
        $region19: #{_ppo_forward_impl.1} parent=11 // pred_region
          _
        $region20: #{_ppo_forward_impl.1} parent=11 // pred_fallthru
          _
        // Predicated region
        $region21: #{_ppo_forward_impl.1} parent=11 // pred_check
          %p214 = pneg %p104
        $region22: #{_ppo_forward_impl.1} parent=11 // pred_check_branch
          %216 = sbr.rel (%p214) target = $region24
        $region23: #{_ppo_forward_impl.1} parent=11 // pred_region
          %s218 = ssub.s32 2048, 2048
          %219 = vsyncadd [#allocation3], %s218
          %s220 = sshll.u32 [#allocation2], 4
          %s221 = int_to_ptr.vmem [resolvable:$true] %s220
          %226 = dma.hbm_to_vmem [thread:$0]  %s3, 2048, %s221, [#allocation3], 128, 128, 8
        $region24: #{_ppo_forward_impl.1} parent=11 // pred_fallthru
          _
        // Predicated region
        $region25: #{_ppo_forward_impl.1} parent=11 // pred_check
          %p227 = pneg %p125
        $region26: #{_ppo_forward_impl.1} parent=11 // pred_check_branch
          %229 = sbr.rel (%p227) target = $region28
        $region27: #{_ppo_forward_impl.1} parent=11 // pred_region
          _
        $region28: #{_ppo_forward_impl.1} parent=11 // pred_fallthru
          _
        // Predicated region
        $region29: #{_ppo_forward_impl.1} parent=11 // pred_check
          %p230 = pneg %p146
        $region30: #{_ppo_forward_impl.1} parent=11 // pred_check_branch
          %232 = sbr.rel (%p230) target = $region32
        $region31: #{_ppo_forward_impl.1} parent=11 // pred_region
          %s234 = ssub.s32 2048, 2048
          %235 = vsyncadd [#allocation5], %s234
          %s236 = sshll.u32 [#allocation4], 4
          %s237 = int_to_ptr.vmem [resolvable:$true] %s236
          %242 = dma.hbm_to_vmem [thread:$0]  %s5, 2048, %s237, [#allocation5], 128, 128, 8
        $region32: #{_ppo_forward_impl.1} parent=11 // pred_fallthru
          _
        // Predicated region
        $region33: #{_ppo_forward_impl.1} parent=11 // pred_check
          %p243 = pneg %p167
        $region34: #{_ppo_forward_impl.1} parent=11 // pred_check_branch
          %245 = sbr.rel (%p243) target = $region36
        $region35: #{_ppo_forward_impl.1} parent=11 // pred_region
          _
        $region36: #{_ppo_forward_impl.1} parent=11 // pred_fallthru
          _
      $region12: #{_ppo_forward_impl.1} parent=5 // pred_fallthru
        _
      %p246 = scmp.lt.s32.totalorder %s15, 2
      // Predicated region
      $region37: #{_ppo_forward_impl.1} parent=5 // pred_check
        %p247 = pneg %p246
      $region38: #{_ppo_forward_impl.1} parent=5 // pred_check_branch
        %249 = sbr.rel (%p247) target = $region40
      $region39: #{_ppo_forward_impl.1} parent=5 // pred_region
        // Predicated region
        $region41: #{_ppo_forward_impl.1} parent=39 // pred_check
          %p250 = pneg %p35
        $region42: #{_ppo_forward_impl.1} parent=39 // pred_check_branch
          %252 = sbr.rel (%p250) target = $region44
        $region43: #{_ppo_forward_impl.1} parent=39 // pred_region
          %p253 = scmp.lt.s32.totalorder %s15, 1
          %s254 = scalar_select %p253, %s15, 1
          %s255 = smul.addr %s254, 8
          %s256 = scalar_lea.vmem %s0, %s255
        $region44: #{_ppo_forward_impl.1} parent=39 // pred_fallthru
          _
      $region40: #{_ppo_forward_impl.1} parent=5 // pred_fallthru
        _
      %p257 = scmp.le.s32.totalorder 1, %s15
      %p258 = scmp.lt.s32.totalorder %s15, 3
      %p259 = pnand %p257, %p258
      %p260 = pneg %p259
      // Predicated region
      $region45: #{_ppo_forward_impl.1} parent=5 // pred_check
        _
      $region46: #{_ppo_forward_impl.1} parent=5 // pred_check_branch
        %262 = sbr.rel (%p259) target = $region48
      $region47: #{_ppo_forward_impl.1} parent=5 // pred_region
        %s263 = ssub.s32 %s15, 1
        // Predicated region
        $region49: #{_ppo_forward_impl.1} parent=47 // pred_check
          %p264 = pneg %p104
        $region50: #{_ppo_forward_impl.1} parent=47 // pred_check_branch
          %266 = sbr.rel (%p264) target = $region52
        $region51: #{_ppo_forward_impl.1} parent=47 // pred_region
          %267 = dma.done [#allocation3], 2048
        $region52: #{_ppo_forward_impl.1} parent=47 // pred_fallthru
          _
        // Predicated region
        $region53: #{_ppo_forward_impl.1} parent=47 // pred_check
          %p268 = pneg %p146
        $region54: #{_ppo_forward_impl.1} parent=47 // pred_check_branch
          %270 = sbr.rel (%p268) target = $region56
        $region55: #{_ppo_forward_impl.1} parent=47 // pred_region
          %271 = dma.done [#allocation5], 2048
        $region56: #{_ppo_forward_impl.1} parent=47 // pred_fallthru
          _
        %p272 = scmp.lt.s32.totalorder %s20, 1
        %s273 = scalar_select %p272, %s20, 1
        %s274 = smul.addr %s273, 8
        %s275 = scalar_lea.vmem %s0, %s274
        %p276 = pneg %p41
        %p277 = pneg %p38
        %p278 = pneg %p62
        %p279 = pneg %p59
        %p280 = pneg %p83
        %p281 = pneg %p80
        %p282 = pneg %p104
        %p283 = pneg %p101
        %p284 = pneg %p125
        %p285 = pneg %p122
        %p286 = pneg %p146
        %p287 = pneg %p143
        %p288 = pneg %p167
        %p289 = pneg %p164
        %p290 = pneg %p193
        %p291 = pneg %p190
        %p292 = scmp.lt.s32.totalorder %s20, 1
        %s293 = scalar_select %p292, %s20, 1
        %s294 = smul.addr %s293, 8
        %s295 = scalar_lea.vmem %s7, %s294
        %p296 = scmp.lt.s32.totalorder %s20, 1
        %s297 = scalar_select %p296, %s20, 1
        %s298 = smul.addr %s297, 8
        %s299 = scalar_lea.vmem %s0, %s298
        %p300 = scmp.lt.s32.totalorder %s20, 1
        %s301 = scalar_select %p300, %s20, 1
        %s302 = smul.addr %s301, 8
        %s303 = scalar_lea.vmem %s7, %s302
        %v304 = vld [vmem:[%s299] sm:$0xff]
        %v305 = vld [vmem:[%s1] sm:$0xff]
        %v306 = vld [vmem:[%s2] sm:$0x1]
        %v308 = vlaneseq
        %v309 = vshrl.u32 %v308, 7
        %v310 = vsub.s32 0, %v309
        %v311 = vrot.slane %v306, %v310
        %vm313 = vcmask 64512
        %v315 = vsel %vm313, %v304, 0
        %317 = vmatprep.subr.mxu0 0.0
        %318 = vmatpush1.msra.mxu0 %v305
        %319 = vmatprep.subr.mxu0 0.0
        %320 = vmatpush1.msra.mxu0 0.0
        %321 = vmatprep.subr.mxu0 0.0
        %322 = vmatpush1.msra.mxu0 0.0
        %323 = vmatprep.subr.mxu0 0.0
        %324 = vmatpush1.msra.mxu0 0.0
        %325 = vmatprep.subr.mxu0 0.0
        %326 = vmatpush1.msra.mxu0 0.0
        %327 = vmatprep.subr.mxu0 0.0
        %328 = vmatpush1.msra.mxu0 0.0
        %329 = vmatprep.subr.mxu0 0.0
        %330 = vmatpush1.msra.mxu0 0.0
        %331 = vmatprep.subr.mxu0 0.0
        %332 = vmatpush1.msra.mxu0 0.0
        %333 = vmatprep.subr.mxu0 0.0
        %334 = vmatpush1.msra.mxu0 0.0
        %335 = vmatprep.subr.mxu0 0.0
        %336 = vmatpush1.msra.mxu0 0.0
        %337 = vmatprep.subr.mxu0 0.0
        %338 = vmatpush1.msra.mxu0 0.0
        %339 = vmatprep.subr.mxu0 0.0
        %340 = vmatpush1.msra.mxu0 0.0
        %341 = vmatprep.subr.mxu0 0.0
        %342 = vmatpush1.msra.mxu0 0.0
        %343 = vmatprep.subr.mxu0 0.0
        %344 = vmatpush1.msra.mxu0 0.0
        %345 = vmatprep.subr.mxu0 0.0
        %346 = vmatpush1.msra.mxu0 0.0
        %347 = vmatprep.subr.mxu0 0.0
        %348 = vmatpush1.msra.mxu0 0.0
        %349 = vmatprep.subr.mxu0 0.0
        %350 = vmatpush1.msra.mxu0 0.0
        %351 = vmatprep.subr.mxu0 0.0
        %352 = vmatpush1.msra.mxu0 0.0
        %353 = vmatprep.subr.mxu0 0.0
        %354 = vmatpush1.msra.mxu0 0.0
        %355 = vmatprep.subr.mxu0 0.0
        %356 = vmatpush1.msra.mxu0 0.0
        %357 = vmatprep.subr.mxu0 0.0
        %358 = vmatpush1.msra.mxu0 0.0
        %359 = vmatprep.subr.mxu0 0.0
        %360 = vmatpush1.msra.mxu0 0.0
        %361 = vmatprep.subr.mxu0 0.0
        %362 = vmatpush1.msra.mxu0 0.0
        %363 = vmatprep.subr.mxu0 0.0
        %364 = vmatpush1.msra.mxu0 0.0
        %365 = vmatprep.subr.mxu0 0.0
        %366 = vmatpush1.msra.mxu0 0.0
        %367 = vmatprep.subr.mxu0 0.0
        %368 = vmatpush1.msra.mxu0 0.0
        %369 = vmatprep.subr.mxu0 0.0
        %370 = vmatpush1.msra.mxu0 0.0
        %371 = vmatprep.subr.mxu0 0.0
        %372 = vmatpush1.msra.mxu0 0.0
        %373 = vmatprep.subr.mxu0 0.0
        %374 = vmatpush1.msra.mxu0 0.0
        %375 = vmatprep.subr.mxu0 0.0
        %376 = vmatpush1.msra.mxu0 0.0
        %377 = vmatprep.subr.mxu0 0.0
        %378 = vmatpush1.msra.mxu0 0.0
        %379 = vmatprep.subr.mxu0 0.0
        %380 = vmatpush1.msra.mxu0 0.0
        %381 = vmatprep.mubr.f32.mxu0 0.0
        %382 = vmatmul.mubr.f32.gmra.mrb[0].mxu0 %v315
        %v383 = vpop.f32.mrb[0].mxu0
        %v384 = vadd.f32 %v311, %v383
        %v385 = vpop.f32.mrb[0].mxu0
        %386 = vdwg.mxu0
        %v387 = vmax.f32 %v384, 0.0
        %v388 = vld [vmem:[#allocation2] sm:$0xff]
        %v389 = vld [vmem:[#allocation2 + $0x8] sm:$0xff]
        %v390 = vld [vmem:[#allocation2 + $0x10] sm:$0xff]
        %v391 = vld [vmem:[#allocation2 + $0x18] sm:$0xff]
        %v392 = vld [vmem:[#allocation2 + $0x20] sm:$0xff]
        %v393 = vld [vmem:[#allocation2 + $0x28] sm:$0xff]
        %v394 = vld [vmem:[#allocation2 + $0x30] sm:$0xff]
        %v395 = vld [vmem:[#allocation2 + $0x38] sm:$0xff]
        %v396 = vld [vmem:[#allocation2 + $0x40] sm:$0xff]
        %v397 = vld [vmem:[#allocation2 + $0x48] sm:$0xff]
        %v398 = vld [vmem:[#allocation2 + $0x50] sm:$0xff]
        %v399 = vld [vmem:[#allocation2 + $0x58] sm:$0xff]
        %v400 = vld [vmem:[#allocation2 + $0x60] sm:$0xff]
        %v401 = vld [vmem:[#allocation2 + $0x68] sm:$0xff]
        %v402 = vld [vmem:[#allocation2 + $0x70] sm:$0xff]
        %v403 = vld [vmem:[#allocation2 + $0x78] sm:$0xff]
        %v404 = vld [vmem:[%s4] sm:$0x1]
        %v406 = vlaneseq
        %v407 = vshrl.u32 %v406, 7
        %v408 = vsub.s32 0, %v407
        %v409 = vrot.slane %v404, %v408
        %411 = vmatprep.subr.mxu0 0.0
        %412 = vmatpush1.msra.mxu0 %v388
        %413 = vmatprep.subr.mxu0 0.0
        %414 = vmatpush1.msra.mxu0 %v389
        %415 = vmatprep.subr.mxu0 0.0
        %416 = vmatpush1.msra.mxu0 %v390
        %417 = vmatprep.subr.mxu0 0.0
        %418 = vmatpush1.msra.mxu0 %v391
        %419 = vmatprep.subr.mxu0 0.0
        %420 = vmatpush1.msra.mxu0 %v392
        %421 = vmatprep.subr.mxu0 0.0
        %422 = vmatpush1.msra.mxu0 %v393
        %423 = vmatprep.subr.mxu0 0.0
        %424 = vmatpush1.msra.mxu0 %v394
        %425 = vmatprep.subr.mxu0 0.0
        %426 = vmatpush1.msra.mxu0 %v395
        %427 = vmatprep.subr.mxu0 0.0
        %428 = vmatpush1.msra.mxu0 %v396
        %429 = vmatprep.subr.mxu0 0.0
        %430 = vmatpush1.msra.mxu0 %v397
        %431 = vmatprep.subr.mxu0 0.0
        %432 = vmatpush1.msra.mxu0 %v398
        %433 = vmatprep.subr.mxu0 0.0
        %434 = vmatpush1.msra.mxu0 %v399
        %435 = vmatprep.subr.mxu0 0.0
        %436 = vmatpush1.msra.mxu0 %v400
        %437 = vmatprep.subr.mxu0 0.0
        %438 = vmatpush1.msra.mxu0 %v401
        %439 = vmatprep.subr.mxu0 0.0
        %440 = vmatpush1.msra.mxu0 %v402
        %441 = vmatprep.subr.mxu0 0.0
        %442 = vmatpush1.msra.mxu0 %v403
        %443 = vmatprep.subr.mxu0 0.0
        %444 = vmatpush1.msra.mxu0 0.0
        %445 = vmatprep.subr.mxu0 0.0
        %446 = vmatpush1.msra.mxu0 0.0
        %447 = vmatprep.subr.mxu0 0.0
        %448 = vmatpush1.msra.mxu0 0.0
        %449 = vmatprep.subr.mxu0 0.0
        %450 = vmatpush1.msra.mxu0 0.0
        %451 = vmatprep.subr.mxu0 0.0
        %452 = vmatpush1.msra.mxu0 0.0
        %453 = vmatprep.subr.mxu0 0.0
        %454 = vmatpush1.msra.mxu0 0.0
        %455 = vmatprep.subr.mxu0 0.0
        %456 = vmatpush1.msra.mxu0 0.0
        %457 = vmatprep.subr.mxu0 0.0
        %458 = vmatpush1.msra.mxu0 0.0
        %459 = vmatprep.subr.mxu0 0.0
        %460 = vmatpush1.msra.mxu0 0.0
        %461 = vmatprep.subr.mxu0 0.0
        %462 = vmatpush1.msra.mxu0 0.0
        %463 = vmatprep.subr.mxu0 0.0
        %464 = vmatpush1.msra.mxu0 0.0
        %465 = vmatprep.subr.mxu0 0.0
        %466 = vmatpush1.msra.mxu0 0.0
        %467 = vmatprep.subr.mxu0 0.0
        %468 = vmatpush1.msra.mxu0 0.0
        %469 = vmatprep.subr.mxu0 0.0
        %470 = vmatpush1.msra.mxu0 0.0
        %471 = vmatprep.subr.mxu0 0.0
        %472 = vmatpush1.msra.mxu0 0.0
        %473 = vmatprep.subr.mxu0 0.0
        %474 = vmatpush1.msra.mxu0 0.0
        %475 = vmatprep.mubr.f32.mxu0 0.0
        %476 = vmatmul.mubr.f32.gmra.mrb[0].mxu0 %v387
        %v477 = vpop.f32.mrb[0].mxu0
        %v478 = vadd.f32 %v409, %v477
        %v479 = vpop.f32.mrb[0].mxu0
        %480 = vdwg.mxu0
        %v481 = vmax.f32 %v478, 0.0
        %v482 = vld [vmem:[#allocation4] sm:$0xff]
        %v483 = vld [vmem:[#allocation4 + $0x8] sm:$0xff]
        %v484 = vld [vmem:[#allocation4 + $0x10] sm:$0xff]
        %v485 = vld [vmem:[#allocation4 + $0x18] sm:$0xff]
        %v486 = vld [vmem:[#allocation4 + $0x20] sm:$0xff]
        %v487 = vld [vmem:[#allocation4 + $0x28] sm:$0xff]
        %v488 = vld [vmem:[#allocation4 + $0x30] sm:$0xff]
        %v489 = vld [vmem:[#allocation4 + $0x38] sm:$0xff]
        %v490 = vld [vmem:[#allocation4 + $0x40] sm:$0xff]
        %v491 = vld [vmem:[#allocation4 + $0x48] sm:$0xff]
        %v492 = vld [vmem:[#allocation4 + $0x50] sm:$0xff]
        %v493 = vld [vmem:[#allocation4 + $0x58] sm:$0xff]
        %v494 = vld [vmem:[#allocation4 + $0x60] sm:$0xff]
        %v495 = vld [vmem:[#allocation4 + $0x68] sm:$0xff]
        %v496 = vld [vmem:[#allocation4 + $0x70] sm:$0xff]
        %v497 = vld [vmem:[#allocation4 + $0x78] sm:$0xff]
        %v498 = vld [vmem:[%s6] sm:$0x1]
        %v500 = vlaneseq
        %v501 = vshrl.u32 %v500, 7
        %v502 = vsub.s32 0, %v501
        %v503 = vrot.slane %v498, %v502
        %505 = vmatprep.subr.mxu0 0.0
        %506 = vmatpush1.msra.mxu0 %v482
        %507 = vmatprep.subr.mxu0 0.0
        %508 = vmatpush1.msra.mxu0 %v483
        %509 = vmatprep.subr.mxu0 0.0
        %510 = vmatpush1.msra.mxu0 %v484
        %511 = vmatprep.subr.mxu0 0.0
        %512 = vmatpush1.msra.mxu0 %v485
        %513 = vmatprep.subr.mxu0 0.0
        %514 = vmatpush1.msra.mxu0 %v486
        %515 = vmatprep.subr.mxu0 0.0
        %516 = vmatpush1.msra.mxu0 %v487
        %517 = vmatprep.subr.mxu0 0.0
        %518 = vmatpush1.msra.mxu0 %v488
        %519 = vmatprep.subr.mxu0 0.0
        %520 = vmatpush1.msra.mxu0 %v489
        %521 = vmatprep.subr.mxu0 0.0
        %522 = vmatpush1.msra.mxu0 %v490
        %523 = vmatprep.subr.mxu0 0.0
        %524 = vmatpush1.msra.mxu0 %v491
        %525 = vmatprep.subr.mxu0 0.0
        %526 = vmatpush1.msra.mxu0 %v492
        %527 = vmatprep.subr.mxu0 0.0
        %528 = vmatpush1.msra.mxu0 %v493
        %529 = vmatprep.subr.mxu0 0.0
        %530 = vmatpush1.msra.mxu0 %v494
        %531 = vmatprep.subr.mxu0 0.0
        %532 = vmatpush1.msra.mxu0 %v495
        %533 = vmatprep.subr.mxu0 0.0
        %534 = vmatpush1.msra.mxu0 %v496
        %535 = vmatprep.subr.mxu0 0.0
        %536 = vmatpush1.msra.mxu0 %v497
        %537 = vmatprep.subr.mxu0 0.0
        %538 = vmatpush1.msra.mxu0 0.0
        %539 = vmatprep.subr.mxu0 0.0
        %540 = vmatpush1.msra.mxu0 0.0
        %541 = vmatprep.subr.mxu0 0.0
        %542 = vmatpush1.msra.mxu0 0.0
        %543 = vmatprep.subr.mxu0 0.0
        %544 = vmatpush1.msra.mxu0 0.0
        %545 = vmatprep.subr.mxu0 0.0
        %546 = vmatpush1.msra.mxu0 0.0
        %547 = vmatprep.subr.mxu0 0.0
        %548 = vmatpush1.msra.mxu0 0.0
        %549 = vmatprep.subr.mxu0 0.0
        %550 = vmatpush1.msra.mxu0 0.0
        %551 = vmatprep.subr.mxu0 0.0
        %552 = vmatpush1.msra.mxu0 0.0
        %553 = vmatprep.subr.mxu0 0.0
        %554 = vmatpush1.msra.mxu0 0.0
        %555 = vmatprep.subr.mxu0 0.0
        %556 = vmatpush1.msra.mxu0 0.0
        %557 = vmatprep.subr.mxu0 0.0
        %558 = vmatpush1.msra.mxu0 0.0
        %559 = vmatprep.subr.mxu0 0.0
        %560 = vmatpush1.msra.mxu0 0.0
        %561 = vmatprep.subr.mxu0 0.0
        %562 = vmatpush1.msra.mxu0 0.0
        %563 = vmatprep.subr.mxu0 0.0
        %564 = vmatpush1.msra.mxu0 0.0
        %565 = vmatprep.subr.mxu0 0.0
        %566 = vmatpush1.msra.mxu0 0.0
        %567 = vmatprep.subr.mxu0 0.0
        %568 = vmatpush1.msra.mxu0 0.0
        %569 = vmatprep.mubr.f32.mxu0 0.0
        %570 = vmatmul.mubr.f32.gmra.mrb[0].mxu0 %v481
        %v571 = vpop.f32.mrb[0].mxu0
        %v572 = vadd.f32 %v503, %v571
        %v573 = vpop.f32.mrb[0].mxu0
        %574 = vdwg.mxu0
        %575 = vst [vmem:[%s303] sm:$0xff] %v572
        %p576 = scmp.lt.s32.totalorder %s20, 1
        %s577 = scalar_select %p576, %s20, 1
        %s578 = smul.addr %s577, 8
        %s579 = scalar_lea.vmem %s7, %s578
        // Predicated region
        $region57: #{_ppo_forward_impl.1} parent=47 // pred_check
          %p580 = pneg %p190
        $region58: #{_ppo_forward_impl.1} parent=47 // pred_check_branch
          %582 = sbr.rel (%p580) target = $region60
        $region59: #{_ppo_forward_impl.1} parent=47 // pred_region
          _
        $region60: #{_ppo_forward_impl.1} parent=47 // pred_fallthru
          _
      $region48: #{_ppo_forward_impl.1} parent=5 // pred_fallthru
        _
      %p583 = scmp.le.s32.totalorder 2, %s15
      // Predicated region
      $region61: #{_ppo_forward_impl.1} parent=5 // pred_check
        %p584 = pneg %p583
      $region62: #{_ppo_forward_impl.1} parent=5 // pred_check_branch
        %586 = sbr.rel (%p584) target = $region64
      $region63: #{_ppo_forward_impl.1} parent=5 // pred_region
        %s587 = ssub.s32 %s15, 2
        // Predicated region
        $region65: #{_ppo_forward_impl.1} parent=63 // pred_check
          %p588 = pneg %p196
        $region66: #{_ppo_forward_impl.1} parent=63 // pred_check_branch
          %590 = sbr.rel (%p588) target = $region68
        $region67: #{_ppo_forward_impl.1} parent=63 // pred_region
          %p591 = scmp.lt.s32.totalorder %s21, 1
          %s592 = scalar_select %p591, %s21, 1
          %s593 = smul.addr %s592, 8
          %s594 = scalar_lea.vmem %s7, %s593
        $region68: #{_ppo_forward_impl.1} parent=63 // pred_fallthru
          _
      $region64: #{_ppo_forward_impl.1} parent=5 // pred_fallthru
        _
    $region6: #{_ppo_forward_impl.1} parent=1 // loop_footer
      %s19 = sadd.s32 1, %s15
    $region7: #{_ppo_forward_impl.1} parent=1 // loop_footer_branch
      %14 = sbr.rel target = $region3
    $region8: #{_ppo_forward_impl.1} parent=1 // loop_exit
      _
    %595 = vsyncpa [#allocation3], 1
    %s596 = scalar_lea.sflag [#allocation3], 1
    %597 = vsyncpa %s596, 1
    %598 = vsyncpa [#allocation5], 1

</llo_original>
